<compile_context>
chip_gen: v5e
topology: v5e:2x2
jax: 0.10.0
libtpu: 0.0.40
codegen_flags: <defaults>
</compile_context>

<pallas_src>
import numpy as np
import jax
import jax.numpy as jnp
from jax.experimental import pallas as pl
from jax.experimental.pallas import tpu as pltpu


def _build_pe_mask(length: int, dmodel: int) -> jnp.ndarray:
    """Reproduce the numpy construction from the PyTorch __init__ exactly."""
    pos_part = np.tile(np.arange(length), dmodel).reshape(dmodel, length).T
    i_part = np.tile(
        np.tile(np.arange(int(dmodel / 2)) * 2, (2, 1)).T.ravel(), length
    ).reshape(length, dmodel)
    # NOTE: faithful to the source - this *multiplies* by 10^(4*i/d)
    # (i.e. 10000^(2i/d)) rather than dividing, which is numerically suspect
    # for long sequences but matches the cited module.
    mask = pos_part * 10.0 ** (4.0 * i_part / dmodel)
    mask[:, ::2] = np.sin(mask[:, ::2])
    mask[:, 1::2] = np.cos(mask[:, 1::2])
    mask = mask.reshape(1, length, dmodel)
    return jnp.asarray(mask, dtype=jnp.float32)


def _add_pe_kernel(x_ref, mask_ref, o_ref):
    # x_ref: (TB, TC) tile of x, mask_ref: (1, TC) broadcast row.
    # Broadcast over sublanes is free (VPU); one lane-dense store per tile.
    # astype is a no-op for f32 and handles a bf16 x / f32 mask promotion.
    o_ref[...] = (x_ref[...] + mask_ref[...]).astype(o_ref.dtype)


def _hw_budget():
    """Return (tile_target_bytes, vmem_limit_bytes, min_parallel_steps).

    Derived from the TPU generation's VMEM capacity so one code path produces
    sane tiling on v5e/v6e (128 MiB VMEM, 1 TC) and v7x (64 MiB/TC, 2 TCs).
    """
    vmem_bytes = None
    try:
        info = pltpu.get_tpu_info()
        vmem_bytes = getattr(info, "vmem_capacity_bytes", None)
    except Exception:
        vmem_bytes = None
    if vmem_bytes is None:
        vmem_bytes = 64 * 1024 * 1024  # conservative floor (v7x per-TC VMEM)

    if vmem_bytes <= 64 * 1024 * 1024:
        # v7x-like: ~3.2 TB/s HBM per TC, 2 TensorCores per chip.
        # ~10 MiB x tiles; 2*(x)+2*(out)+mask ~= 4.1x tile < 48 MiB < 64 MiB.
        return 10 * 1024 * 1024, 48 * 1024 * 1024, 2
    # v5e/v6e-like: 128 MiB physical VMEM, single TensorCore.  8 MiB tiles
    # are the sweet spot on v6e and harmless on v5e (ample VMEM headroom).
    return 8 * 1024 * 1024, 64 * 1024 * 1024, 1


def _choose_tiles(B, LD, itemsize, tile_target, min_parallel_steps):
    """Pick (block_rows, block_cols) for the flattened (B, LD) problem."""
    min_rows = B if B <= 8 else 8

    # Lane (last-dim) tile: multiple of 128, or the full LD.
    if LD % 128 != 0 or min_rows * LD * itemsize <= tile_target:
        block_cols = LD
    else:
        block_cols = max(128, (tile_target // (itemsize * min_rows)) // 128 * 128)
        block_cols = min(block_cols, LD)

    if block_cols < LD or B <= 8:
        # Column tiling already amortizes per-step overhead (or B is tiny).
        block_rows = min_rows
    else:
        # block_cols saturated at LD: grow rows (multiples of 8) toward the
        # byte target instead of pinning at 8 (feedback item #1).
        by_target = max(8, (tile_target // (LD * itemsize)) // 8 * 8)
        block_rows = B if by_target >= B else by_target
        if min_parallel_steps > 1:
            # v7x: keep >= min_parallel_steps row tiles so both TCs get work.
            r_cap = ((B - 1) // (min_parallel_steps - 1)) // 8 * 8
            if r_cap >= 8:
                block_rows = min(block_rows, r_cap)
    return block_rows, block_cols


def positional_encoding_forward(
    x: jnp.ndarray,
    mask: jnp.ndarray,
    *,
    block_rows: int | None = None,
    block_cols: int | None = None,
    donate_x: bool = False,
) -> jnp.ndarray:
    """x: (B, L, D), mask: (1, L, D) float32 -> (B, L, D)."""
    B, L, D = x.shape
    assert mask.shape == (1, L, D)
    LD = L * D
    itemsize = jnp.dtype(x.dtype).itemsize
    mask_itemsize = jnp.dtype(mask.dtype).itemsize

    tile_target, vmem_limit, min_par = _hw_budget()

    # Present a lane-dense 2-D view: last dim = L*D.
    x2 = x.reshape(B, LD)
    m2 = mask.reshape(1, LD)

    auto_rows, auto_cols = _choose_tiles(B, LD, itemsize, tile_target, min_par)
    if block_rows is None:
        block_rows = auto_rows
    if block_cols is None:
        block_cols = auto_cols

    # Grid = (col tiles, row tiles); row axis innermost so the mask block
    # index never changes across consecutive steps.
    grid = (pl.cdiv(LD, block_cols), pl.cdiv(B, block_rows))

    if block_cols == LD:
        # Whole mask row resident; constant block index => DMA'd exactly once.
        mask_spec = pl.BlockSpec((1, LD), lambda c, r: (0, 0))
    else:
        # Column-tiled mask: index constant across the inner row axis, so one
        # buffer suffices - the second would be pure VMEM waste (feedback).
        mask_spec = pl.BlockSpec(
            (1, block_cols), lambda c, r: (0, c), pipeline_mode=pl.Buffered(1)
        )

    cost = pl.CostEstimate(
        flops=B * LD,  # one add per element
        transcendentals=0,
        bytes_accessed=2 * B * LD * itemsize + LD * mask_itemsize,
    )

    extra_kwargs = {}
    if donate_x:
        # Reuse x's output buffer (only when callers do not reuse x).
        extra_kwargs["input_output_aliases"] = {0: 0}

    out2 = pl.pallas_call(
        _add_pe_kernel,
        out_shape=jax.ShapeDtypeStruct((B, LD), x.dtype),
        grid_spec=pltpu.PrefetchScalarGridSpec(
            num_scalar_prefetch=0,
            grid=grid,
            in_specs=[
                # x: (row tile r, col tile c); default 2-deep buffering.
                pl.BlockSpec((block_rows, block_cols), lambda c, r: (r, c)),
                mask_spec,
            ],
            out_specs=pl.BlockSpec((block_rows, block_cols), lambda c, r: (r, c)),
        ),
        compiler_params=pltpu.CompilerParams(
            dimension_semantics=("parallel", "parallel"),
            vmem_limit_bytes=vmem_limit,
        ),
        cost_estimate=cost,
        **extra_kwargs,
    )(x2, m2)

    return out2.reshape(B, L, D)


if __name__ == "__main__":
    # Small shapes consistent with the module: (batch=2, length=8, dmodel=32)
    B, L, D = 2, 8, 32
    key = jax.random.PRNGKey(0)
    x = jax.random.normal(key, (B, L, D), dtype=jnp.float32)

    mask = _build_pe_mask(L, D)

    out = positional_encoding_forward(x, mask)
    out = jax.block_until_ready(out)

    # Reference check in plain JAX (same semantics as the PyTorch forward).
    ref = x + mask
    assert out.shape == (B, L, D)
    assert jnp.allclose(out, ref, atol=1e-6, rtol=1e-6), "mismatch vs reference"

    print("KERNEL_OK")
</pallas_src>

<mosaic_0001>
module attributes {stable_mosaic.version = 11 : i64} {
  func.func @_add_pe_kernel(%arg0: i32, %arg1: i32, %arg2: memref<2x256xf32, #tpu.memory_space<vmem>>, %arg3: memref<1x256xf32, #tpu.memory_space<vmem>>, %arg4: memref<2x256xf32, #tpu.memory_space<vmem>>) attributes {dimension_semantics = [#tpu.dimension_semantics<parallel>, #tpu.dimension_semantics<parallel>], iteration_bounds = array<i64: 1, 1>, scalar_prefetch = 0 : i64, scratch_operands = 0 : i64, tpu.core_type = #tpu.core_type<tc>, window_params = [{transform_indices = @transform_0, window_bounds = array<i64: 2, 256>}, {pipeline_mode = #tpu.pipeline_mode<synchronous>, transform_indices = @transform_1, window_bounds = array<i64: 1, 256>}, {transform_indices = @transform_2, window_bounds = array<i64: 2, 256>}]} {
    %c0 = arith.constant 0 : index
    %c0_0 = arith.constant 0 : index
    %0 = vector.load %arg2[%c0, %c0_0] : memref<2x256xf32, #tpu.memory_space<vmem>>, vector<2x256xf32>
    %c0_1 = arith.constant 0 : index
    %c0_2 = arith.constant 0 : index
    %1 = vector.load %arg3[%c0_1, %c0_2] : memref<1x256xf32, #tpu.memory_space<vmem>>, vector<1x256xf32>
    %2 = vector.broadcast %1 : vector<1x256xf32> to vector<2x256xf32>
    %3 = arith.addf %0, %2 : vector<2x256xf32>
    %c0_3 = arith.constant 0 : index
    %c0_4 = arith.constant 0 : index
    %4 = vector.load %arg4[%c0_3, %c0_4] : memref<2x256xf32, #tpu.memory_space<vmem>>, vector<2x256xf32>
    tpu.vector_store %arg4[%c0_3, %c0_4], %3 {strides = array<i32>} : memref<2x256xf32, #tpu.memory_space<vmem>>, vector<2x256xf32>,
    return
  }
  func.func @transform_0(%arg0: i32, %arg1: i32) -> (i32, i32) {
    %c0_i32 = arith.constant 0 : i32
    return %arg1, %arg0 : i32, i32
  }
  func.func @transform_1(%arg0: i32, %arg1: i32) -> (i32, i32) {
    %c0_i32 = arith.constant 0 : i32
    %c0_i32_0 = arith.constant 0 : i32
    %c0_i32_1 = arith.constant 0 : i32
    return %c0_i32, %c0_i32_0 : i32, i32
  }
  func.func @transform_2(%arg0: i32, %arg1: i32) -> (i32, i32) {
    %c0_i32 = arith.constant 0 : i32
    return %arg1, %arg0 : i32, i32
  }
}

</mosaic_0001>

<llo_original>
// kernel: tpu_custom_call.1
$region0: #{tpu_custom_call.1}
  #allocation0 [shape = 'u32[]', space=smem, size = 0x4, offset = 0x4, fixed_abs, tag = 'smem constant byte address 0x4 - core index']
  #allocation1 [shape = 'u32[72,128]{1,0:T(1,128)}', space=vmem, size = 0x9000, scoped, tag = 'internal scratch']
  %s0 = inlined_call_operand.hbm [shape: f32[2,256], index: 0, kind: input, shape index: {}]
  %s1 = inlined_call_operand.hbm [shape: f32[1,256], index: 1, kind: input, shape index: {}]
  %s2 = inlined_call_operand.hbm [shape: f32[2,256], index: 2, kind: output, shape index: {}]
  %s3 = sld [smem:[#allocation0]]
  $region26: #{tpu_custom_call.1} parent=0
    _
  %s5 = ssub.s32 1, %s3
  %s6 = scalar_select 0, %s5, %s3
  $region1: #{tpu_custom_call.1} parent=0
    #allocation2 [shape = 'u8[2048]{0}', space=vmem, size = 0x800, scoped, tag = 'input window, operand 0, single buffered']
    #allocation3 [shape = 's32[1]{0}', space=sflag, size = 0x4, scoped, tag = 'scoped memory for tpu_custom_call.1']
    #allocation4 [shape = 's32[1]{0}', space=sflag, size = 0x4, scoped, tag = 'scoped memory for tpu_custom_call.1']
    #allocation5 [shape = 'u8[1024]{0}', space=vmem, size = 0x400, scoped, tag = 'input window, operand 1, single buffered']
    #allocation6 [shape = 's32[1]{0}', space=sflag, size = 0x4, scoped, tag = 'scoped memory for tpu_custom_call.1']
    #allocation7 [shape = 'u8[2048]{0}', space=vmem, size = 0x800, scoped, tag = 'output window, operand 0, single buffered']
    %7 = vsyncpa [#allocation3], 0
    %8 = vsyncpa [#allocation6], 0
    %9 = vsyncpa [#allocation4], 0
    // Predicated region
    $region2: #{tpu_custom_call.1} parent=1 // pred_check
      _
    $region3: #{tpu_custom_call.1} parent=1 // pred_check_branch
      %11 = sbr.rel (0) target = $region5
    $region4: #{tpu_custom_call.1} parent=1 // pred_region
      %13 = vsyncadd [#allocation3], 0
      %s15 = sshll.u32 %s0, 4
      %s16 = int_to_ptr.hbm [resolvable:$true] %s15
      %s17 = sshll.u32 [#allocation2], 4
      %s18 = int_to_ptr.vmem [resolvable:$true] %s17
      %20 = dma.hbm_to_vmem [thread:$0]  %s16, 64, %s18, [#allocation3]
    $region5: #{tpu_custom_call.1} parent=1 // pred_fallthru
      _
    // Predicated region
    $region6: #{tpu_custom_call.1} parent=1 // pred_check
      _
    $region7: #{tpu_custom_call.1} parent=1 // pred_check_branch
      %22 = sbr.rel (0) target = $region9
    $region8: #{tpu_custom_call.1} parent=1 // pred_region
      %24 = vsyncadd [#allocation6], 0
      %s26 = sshll.u32 %s1, 4
      %s27 = int_to_ptr.hbm [resolvable:$true] %s26
      %s28 = sshll.u32 [#allocation5], 4
      %s29 = int_to_ptr.vmem [resolvable:$true] %s28
      %31 = dma.hbm_to_vmem [thread:$0]  %s27, 32, %s29, [#allocation6]
    $region9: #{tpu_custom_call.1} parent=1 // pred_fallthru
      _
    // Predicated region
    $region10: #{tpu_custom_call.1} parent=1 // pred_check
      _
    $region11: #{tpu_custom_call.1} parent=1 // pred_check_branch
      %33 = sbr.rel (0) target = $region13
    $region12: #{tpu_custom_call.1} parent=1 // pred_region
      %35 = dma.done [#allocation3], 64
    $region13: #{tpu_custom_call.1} parent=1 // pred_fallthru
      _
    // Predicated region
    $region14: #{tpu_custom_call.1} parent=1 // pred_check
      _
    $region15: #{tpu_custom_call.1} parent=1 // pred_check_branch
      %37 = sbr.rel (0) target = $region17
    $region16: #{tpu_custom_call.1} parent=1 // pred_region
      %39 = dma.done [#allocation6], 32
    $region17: #{tpu_custom_call.1} parent=1 // pred_fallthru
      _
    %v40 = vld [vmem:[#allocation2] sm:$0xf]
    %v41 = vld [vmem:[#allocation5] sm:$0x3]
    %v43 = vperm.slane %v41, 0
    %v44 = vperm.slane %v41, 1
    %v45 = vrot.slane %v44, 6
    %vm46 = vcmask 1041408
    %v47 = vsel %vm46, %v43, %v45
    %v49 = vadd.f32 %v40, %v47
    %50 = vst [vmem:[#allocation7] sm:$0xf] %v49
    // Predicated region
    $region18: #{tpu_custom_call.1} parent=1 // pred_check
      _
    $region19: #{tpu_custom_call.1} parent=1 // pred_check_branch
      %52 = sbr.rel (0) target = $region21
    $region20: #{tpu_custom_call.1} parent=1 // pred_region
      %54 = vsyncadd [#allocation4], 0
      %s56 = sshll.u32 [#allocation7], 4
      %s57 = int_to_ptr.vmem [resolvable:$true] %s56
      %s58 = sshll.u32 %s2, 4
      %s59 = int_to_ptr.hbm [resolvable:$true] %s58
      %61 = dma.vmem_to_hbm [thread:$0]  %s57, 64, %s59, [#allocation4]
    $region21: #{tpu_custom_call.1} parent=1 // pred_fallthru
      _
    // Predicated region
    $region22: #{tpu_custom_call.1} parent=1 // pred_check
      _
    $region23: #{tpu_custom_call.1} parent=1 // pred_check_branch
      %63 = sbr.rel (0) target = $region25
    $region24: #{tpu_custom_call.1} parent=1 // pred_region
      %65 = dma.done [#allocation4], 64
    $region25: #{tpu_custom_call.1} parent=1 // pred_fallthru
      _
    %66 = vsyncpa [#allocation3], 1
    %67 = vsyncpa [#allocation6], 1
    %68 = vsyncpa [#allocation4], 1

</llo_original>
